<compile_context>
chip_gen: v7x
topology: tpu7x:2x2x1
jax: 0.10.0
libtpu: 0.0.40
codegen_flags: <defaults>
</compile_context>

<pallas_src>
import jax
import jax.numpy as jnp
from jax import lax
from jax.experimental import pallas as pl
from jax.experimental.pallas import tpu as pltpu

# Geometry_loss.__init__ defaults.
W_D = 1.0
W_A = 2.0
EPS = 1e-12  # matches torch pdist clamp / F.normalize eps


def _round_up(x, m):
    return ((x + m - 1) // m) * m


def _make_kernel(b_real, b_pad, tk, d_real):
    Bp = b_pad
    need_row_mask = (b_pad != b_real)      # batch tail rows of the block are OOB
    need_col_mask = (d_real % tk != 0)     # feature tail of the last K block is OOB

    def kernel(s_ref, t_ref, out_ref, gs_ref, gt_ref, ds_ref, dt_ref,
               inv_s_ref, inv_t_ref):
        k = pl.program_id(0)

        @pl.when(k == 0)
        def _():
            gs_ref[...] = jnp.zeros_like(gs_ref)
            gt_ref[...] = jnp.zeros_like(gt_ref)
            ds_ref[...] = jnp.zeros_like(ds_ref)
            dt_ref[...] = jnp.zeros_like(dt_ref)

        xs = s_ref[...]
        xt = t_ref[...]

        # Zero out-of-range rows / columns of partial blocks (static specialization:
        # no mask code is emitted when B % 8 == 0 and D % tk == 0).
        mask = None
        if need_row_mask:
            r = lax.broadcasted_iota(jnp.int32, (Bp, tk), 0)
            mask = r < b_real
        if need_col_mask:
            c = lax.broadcasted_iota(jnp.int32, (Bp, tk), 1)
            cm = c < (jnp.int32(d_real) - k * tk)   # >= tk on non-last steps
            mask = cm if mask is None else (mask & cm)
        if mask is not None:
            xs = jnp.where(mask, xs, 0)
            xt = jnp.where(mask, xt, 0)

        # MXU: Gram accumulation in native dtype, f32 accumulate.
        dn = (((1,), (1,)), ((), ()))
        gs_ref[...] += lax.dot_general(xs, xs, dn,
                                       preferred_element_type=jnp.float32)
        gt_ref[...] += lax.dot_general(xt, xt, dn,
                                       preferred_element_type=jnp.float32)
        # VPU/XLU: Gram diagonal (per-row sum of squares) rides under the MXU.
        xs32 = xs.astype(jnp.float32)
        xt32 = xt.astype(jnp.float32)
        ds_ref[...] += jnp.sum(xs32 * xs32, axis=1, keepdims=True)
        dt_ref[...] += jnp.sum(xt32 * xt32, axis=1, keepdims=True)

        @pl.when(k == pl.num_programs(0) - 1)
        def _():
            Gs = gs_ref[...]
            Gt = gt_ref[...]

            row = lax.broadcasted_iota(jnp.int32, (Bp, Bp), 0)
            col = lax.broadcasted_iota(jnp.int32, (Bp, Bp), 1)
            diag = row == col
            vmask = (row < b_real) & (col < b_real) & jnp.logical_not(diag)

            def branch(G, dvec_ref):
                dcol = dvec_ref[...]                                   # (Bp,1) ||e_i||^2
                drow = jnp.sum(jnp.where(diag, G, 0.0), axis=0,
                               keepdims=True)                          # (1,Bp) ||e_j||^2
                nrm2 = jnp.maximum(dcol + drow - 2.0 * G, EPS)
                dist = jnp.where(vmask, jnp.sqrt(nrm2), 0.0)           # pdist; diag/pad = 0
                inv_n = jnp.where(vmask, lax.rsqrt(nrm2), 0.0)         # 1/||e_j - e_i||
                pos = dist > 0.0
                cnt = jnp.maximum(jnp.sum(pos.astype(jnp.float32)), 1.0)
                dsum = jnp.sum(jnp.where(pos, dist, 0.0), keepdims=True)    # (1,1)
                inv_mean = cnt * pl.reciprocal(dsum, approx=True)           # EUP slot
                return dist * inv_mean, inv_n

            s_dn, s_inv = branch(Gs, ds_ref)
            t_dn, t_inv = branch(Gt, dt_ref)

            # RKD-distance smooth-L1 (beta=1, mean over B*B). Padded / diagonal
            # entries are 0-0 so they contribute nothing to the sum.
            dd = jnp.abs(s_dn - t_dn)
            hd = jnp.where(dd < 1.0, 0.5 * dd * dd, dd - 0.5)
            loss_d = jnp.sum(hd) * (1.0 / float(b_real * b_real))

            # Stash inv so anchor rows can be fetched with dynamic sublane slices.
            inv_s_ref[...] = s_inv
            inv_t_ref[...] = t_inv

            # RKD-angle smooth-L1, streamed over the anchor index i:
            #   angle_i[j,k] = (G_jk - G_ij - G_ik + G_ii) * inv_ij * inv_ik
            # Rows (1,Bp) and G_ii come from pl.ds reads on the scratch refs.
            # TODO(synk): the two column-oriented (Bp,1) vectors per branch are
            # still one masked reduce each; a dynamic lane-slice / tiny
            # (1,Bp)->(Bp,1) relayout would drop them, kept masked for lowering
            # robustness.
            def body(i, acc):
                cmask = col == i
                g_s_row = gs_ref[pl.ds(i, 1), :]        # (1,Bp)  G_s[i,:]
                g_t_row = gt_ref[pl.ds(i, 1), :]
                i_s_row = inv_s_ref[pl.ds(i, 1), :]
                i_t_row = inv_t_ref[pl.ds(i, 1), :]
                g_s_ii = ds_ref[pl.ds(i, 1), :]         # (1,1)   G_s[i,i]
                g_t_ii = dt_ref[pl.ds(i, 1), :]
                g_s_col = jnp.sum(jnp.where(cmask, Gs, 0.0), axis=1, keepdims=True)
                g_t_col = jnp.sum(jnp.where(cmask, Gt, 0.0), axis=1, keepdims=True)
                i_s_col = jnp.sum(jnp.where(cmask, s_inv, 0.0), axis=1, keepdims=True)
                i_t_col = jnp.sum(jnp.where(cmask, t_inv, 0.0), axis=1, keepdims=True)
                a_s = (Gs - g_s_col - g_s_row + g_s_ii) * (i_s_col * i_s_row)
                a_t = (Gt - g_t_col - g_t_row + g_t_ii) * (i_t_col * i_t_row)
                da = jnp.abs(a_s - a_t)
                # inv == 0 on diag / padded rows -> those entries are 0-0.
                return acc + jnp.where(da < 1.0, 0.5 * da * da, da - 0.5)

            a_acc = lax.fori_loop(0, b_real, body,
                                  jnp.zeros((Bp, Bp), jnp.float32))
            loss_a = jnp.sum(a_acc) * (1.0 / float(b_real) ** 3)

            out_ref[0, 0] = W_D * loss_d + W_A * loss_a

    return kernel


def geometry_loss(f_s, f_t, *, tk=None):
    B = f_s.shape[0]
    s = f_s.reshape(B, -1)
    t = f_t.reshape(B, -1)
    if t.dtype != s.dtype:
        t = t.astype(s.dtype)
    D = s.shape[1]

    itemsize = jnp.dtype(s.dtype).itemsize
    sub = max(8, 32 // max(itemsize, 1))       # 8 for f32, 16 for bf16, 32 for int8
    Bp = _round_up(B, sub)

    if tk is None:
        lane = 256                             # full 256-wide MXU rows on v6e/v7x
        budget = 24 * 1024 * 1024              # double-buffered input blocks (2 in x 2 buf)
        cap = max(lane, ((budget // (4 * Bp * itemsize)) // lane) * lane)
        tk = max(lane, min(2048, cap, _round_up(D, lane)))
    num_k = -(-D // tk)

    # Resident VMEM estimate: double-buffered inputs + Gram/inv/diag scratch +
    # epilogue temporaries. Capped at 56 MiB (safe on v7x's 64 MiB physical VMEM).
    est = (2 * 2 * Bp * tk * itemsize) + (4 * Bp * Bp + 2 * Bp) * 4 + 10 * Bp * Bp * 4
    vmem_limit = int(min(56 * 2**20, max(32 * 2**20, est * 5 // 4)))

    out = pl.pallas_call(
        _make_kernel(B, Bp, tk, D),
        out_shape=jax.ShapeDtypeStruct((1, 1), jnp.float32),
        grid=(num_k,),
        in_specs=[pl.BlockSpec((Bp, tk), lambda k: (0, k)),
                  pl.BlockSpec((Bp, tk), lambda k: (0, k))],
        out_specs=pl.BlockSpec(memory_space=pltpu.MemorySpace.SMEM),
        scratch_shapes=[pltpu.VMEM((Bp, Bp), jnp.float32),   # student Gram
                        pltpu.VMEM((Bp, Bp), jnp.float32),   # teacher Gram
                        pltpu.VMEM((Bp, 1), jnp.float32),    # student diag (||e||^2)
                        pltpu.VMEM((Bp, 1), jnp.float32),    # teacher diag
                        pltpu.VMEM((Bp, Bp), jnp.float32),   # student inv (epilogue)
                        pltpu.VMEM((Bp, Bp), jnp.float32)],  # teacher inv (epilogue)
        compiler_params=pltpu.CompilerParams(
            dimension_semantics=("arbitrary",),   # D is a reduction axis
            vmem_limit_bytes=vmem_limit,
        ),
    )(s, t)
    return out[0, 0]


def _geometry_loss_ref(f_s, f_t):
    # Pure-JAX reference mirroring the PyTorch module (diff-based angle path),
    # used as an independent check of the Gram-based kernel.
    B = f_s.shape[0]
    s = f_s.reshape(B, -1).astype(jnp.float32)
    t = f_t.reshape(B, -1).astype(jnp.float32)
    eye = jnp.eye(B, dtype=bool)

    def pdist(e):
        sq = jnp.sum(e * e, axis=1)
        res = sq[:, None] + sq[None, :] - 2.0 * (e @ e.T)
        res = jnp.sqrt(jnp.maximum(res, EPS))
        return jnp.where(eye, 0.0, res)

    def norm_pd(e):
        d = pdist(e)
        pos = d > 0
        return d / (jnp.sum(jnp.where(pos, d, 0.0)) / jnp.sum(pos))

    def sl1(x, y):
        d = jnp.abs(x - y)
        return jnp.mean(jnp.where(d < 1.0, 0.5 * d * d, d - 0.5))

    def angle(e):
        diff = e[None, :, :] - e[:, None, :]
        nd = diff / jnp.maximum(
            jnp.sqrt(jnp.sum(diff * diff, axis=2, keepdims=True)), EPS)
        return jnp.einsum('ijd,ikd->ijk', nd, nd)

    loss_d = sl1(norm_pd(s), norm_pd(t))
    loss_a = sl1(angle(s), angle(t))
    return W_D * loss_d + W_A * loss_a


if __name__ == "__main__":
    key = jax.random.PRNGKey(0)
    k1, k2 = jax.random.split(key)
    # NCHW features: batch=4, channels=8, spatial=10x10 -> D=800.
    # tk=256 forces a 4-step Gram reduction grid with a masked feature tail
    # (800 % 256 != 0) and masked batch-padding rows (4 -> 8), exercising every
    # kernel path without any host-side padding/staging copy.
    f_s = jax.random.normal(k1, (4, 8, 10, 10), dtype=jnp.float32)
    f_t = jax.random.normal(k2, (4, 8, 10, 10), dtype=jnp.float32)

    loss = geometry_loss(f_s, f_t, tk=256)
    jax.block_until_ready(loss)

    ref = _geometry_loss_ref(f_s, f_t)
    assert jnp.allclose(loss, ref, rtol=1e-2, atol=1e-2), (loss, ref)
    print("KERNEL_OK")
</pallas_src>

<mosaic_0001>
module attributes {stable_mosaic.version = 11 : i64} {
  func.func @kernel(%arg0: i32, %arg1: memref<8x256xf32, #tpu.memory_space<vmem>>, %arg2: memref<8x256xf32, #tpu.memory_space<vmem>>, %arg3: memref<1x1xf32, #tpu.memory_space<smem>>, %arg4: memref<8x8xf32, #tpu.memory_space<vmem>>, %arg5: memref<8x8xf32, #tpu.memory_space<vmem>>, %arg6: memref<8x1xf32, #tpu.memory_space<vmem>>, %arg7: memref<8x1xf32, #tpu.memory_space<vmem>>, %arg8: memref<8x8xf32, #tpu.memory_space<vmem>>, %arg9: memref<8x8xf32, #tpu.memory_space<vmem>>) attributes {dimension_semantics = [#tpu.dimension_semantics<arbitrary>], iteration_bounds = array<i64: 4>, scalar_prefetch = 0 : i64, scratch_operands = 6 : i64, tpu.core_type = #tpu.core_type<tc>, window_params = [{transform_indices = @transform_0, window_bounds = array<i64: 8, 256>}, {transform_indices = @transform_1, window_bounds = array<i64: 8, 256>}, {transform_indices = @transform_2, window_bounds = array<i64: 1, 1>}]} {
    %c0_i32 = arith.constant 0 : i32
    %0 = arith.cmpi eq, %arg0, %c0_i32 : i32
    %1 = arith.extui %0 : i1 to i32
    %c0_i32_0 = arith.constant 0 : i32
    %2 = arith.cmpi ne, %1, %c0_i32_0 : i32
    scf.if %2 {
      %cst_26 = arith.constant 0.000000e+00 : f32
      %43 = vector.broadcast %cst_26 : f32 to vector<8x8xf32>
      %c0_27 = arith.constant 0 : index
      %c0_28 = arith.constant 0 : index
      %44 = vector.load %arg4[%c0_27, %c0_28] : memref<8x8xf32, #tpu.memory_space<vmem>>, vector<8x8xf32>
      tpu.vector_store %arg4[%c0_27, %c0_28], %43 {strides = array<i32>} : memref<8x8xf32, #tpu.memory_space<vmem>>, vector<8x8xf32>,
      %cst_29 = arith.constant 0.000000e+00 : f32
      %45 = vector.broadcast %cst_29 : f32 to vector<8x8xf32>
      %c0_30 = arith.constant 0 : index
      %c0_31 = arith.constant 0 : index
      %46 = vector.load %arg5[%c0_30, %c0_31] : memref<8x8xf32, #tpu.memory_space<vmem>>, vector<8x8xf32>
      tpu.vector_store %arg5[%c0_30, %c0_31], %45 {strides = array<i32>} : memref<8x8xf32, #tpu.memory_space<vmem>>, vector<8x8xf32>,
      %cst_32 = arith.constant 0.000000e+00 : f32
      %47 = vector.broadcast %cst_32 : f32 to vector<8x1xf32>
      %c0_33 = arith.constant 0 : index
      %c0_34 = arith.constant 0 : index
      %48 = vector.load %arg6[%c0_33, %c0_34] : memref<8x1xf32, #tpu.memory_space<vmem>>, vector<8x1xf32>
      tpu.vector_store %arg6[%c0_33, %c0_34], %47 {strides = array<i32>} : memref<8x1xf32, #tpu.memory_space<vmem>>, vector<8x1xf32>,
      %cst_35 = arith.constant 0.000000e+00 : f32
      %49 = vector.broadcast %cst_35 : f32 to vector<8x1xf32>
      %c0_36 = arith.constant 0 : index
      %c0_37 = arith.constant 0 : index
      %50 = vector.load %arg7[%c0_36, %c0_37] : memref<8x1xf32, #tpu.memory_space<vmem>>, vector<8x1xf32>
      tpu.vector_store %arg7[%c0_36, %c0_37], %49 {strides = array<i32>} : memref<8x1xf32, #tpu.memory_space<vmem>>, vector<8x1xf32>,
    } else {
    }
    %c0 = arith.constant 0 : index
    %c0_1 = arith.constant 0 : index
    %3 = vector.load %arg1[%c0, %c0_1] : memref<8x256xf32, #tpu.memory_space<vmem>>, vector<8x256xf32>
    %c0_2 = arith.constant 0 : index
    %c0_3 = arith.constant 0 : index
    %4 = vector.load %arg2[%c0_2, %c0_3] : memref<8x256xf32, #tpu.memory_space<vmem>>, vector<8x256xf32>
    %5 = tpu.iota {dimensions = array<i32: 0>} : vector<8x256xi32>
    %c4_i32 = arith.constant 4 : i32
    %6 = vector.broadcast %c4_i32 : i32 to vector<8x256xi32>
    %7 = arith.cmpi slt, %5, %6 : vector<8x256xi32>
    %8 = tpu.iota {dimensions = array<i32: 1>} : vector<8x256xi32>
    %c256_i32 = arith.constant 256 : i32
    %9 = arith.muli %arg0, %c256_i32 : i32
    %c800_i32 = arith.constant 800 : i32
    %10 = arith.subi %c800_i32, %9 : i32
    %11 = vector.broadcast %10 : i32 to vector<8x256xi32>
    %12 = arith.cmpi slt, %8, %11 : vector<8x256xi32>
    %13 = arith.andi %7, %12 : vector<8x256xi1>
    %c0_i32_4 = arith.constant 0 : i32
    %14 = arith.sitofp %c0_i32_4 : i32 to f32
    %15 = vector.broadcast %14 : f32 to vector<8x256xf32>
    %16 = arith.select %13, %3, %15 : vector<8x256xi1>, vector<8x256xf32>
    %c0_i32_5 = arith.constant 0 : i32
    %17 = arith.sitofp %c0_i32_5 : i32 to f32
    %18 = vector.broadcast %17 : f32 to vector<8x256xf32>
    %19 = arith.select %13, %4, %18 : vector<8x256xi1>, vector<8x256xf32>
    %c0_6 = arith.constant 0 : index
    %c0_7 = arith.constant 0 : index
    %20 = vector.load %arg4[%c0_6, %c0_7] : memref<8x8xf32, #tpu.memory_space<vmem>>, vector<8x8xf32>
    %cst = arith.constant dense<0.000000e+00> : vector<8x8xf32>
    %21 = tpu.matmul %16, %16, %cst {dimension_numbers = #tpu.dot_dimension_numbers<[1], [1], [0], [0], [0, 0, 1, 0], [], []>} : vector<8x256xf32>, vector<8x256xf32>, vector<8x8xf32> -> vector<8x8xf32>
    %22 = arith.addf %20, %21 : vector<8x8xf32>
    %c0_8 = arith.constant 0 : index
    %c0_9 = arith.constant 0 : index
    %23 = vector.load %arg4[%c0_8, %c0_9] : memref<8x8xf32, #tpu.memory_space<vmem>>, vector<8x8xf32>
    tpu.vector_store %arg4[%c0_8, %c0_9], %22 {strides = array<i32>} : memref<8x8xf32, #tpu.memory_space<vmem>>, vector<8x8xf32>,
    %c0_10 = arith.constant 0 : index
    %c0_11 = arith.constant 0 : index
    %24 = vector.load %arg5[%c0_10, %c0_11] : memref<8x8xf32, #tpu.memory_space<vmem>>, vector<8x8xf32>
    %cst_12 = arith.constant dense<0.000000e+00> : vector<8x8xf32>
    %25 = tpu.matmul %19, %19, %cst_12 {dimension_numbers = #tpu.dot_dimension_numbers<[1], [1], [0], [0], [0, 0, 1, 0], [], []>} : vector<8x256xf32>, vector<8x256xf32>, vector<8x8xf32> -> vector<8x8xf32>
    %26 = arith.addf %24, %25 : vector<8x8xf32>
    %c0_13 = arith.constant 0 : index
    %c0_14 = arith.constant 0 : index
    %27 = vector.load %arg5[%c0_13, %c0_14] : memref<8x8xf32, #tpu.memory_space<vmem>>, vector<8x8xf32>
    tpu.vector_store %arg5[%c0_13, %c0_14], %26 {strides = array<i32>} : memref<8x8xf32, #tpu.memory_space<vmem>>, vector<8x8xf32>,
    %c0_15 = arith.constant 0 : index
    %c0_16 = arith.constant 0 : index
    %28 = vector.load %arg6[%c0_15, %c0_16] : memref<8x1xf32, #tpu.memory_space<vmem>>, vector<8x1xf32>
    %29 = arith.mulf %16, %16 : vector<8x256xf32>
    %cst_17 = arith.constant dense<0.000000e+00> : vector<8xf32>
    %30 = vector.multi_reduction <add>, %29, %cst_17 [1] : vector<8x256xf32> to vector<8xf32>
    %31 = vector.shape_cast %30 : vector<8xf32> to vector<8x1xf32>
    %32 = arith.addf %28, %31 : vector<8x1xf32>
    %c0_18 = arith.constant 0 : index
    %c0_19 = arith.constant 0 : index
    %33 = vector.load %arg6[%c0_18, %c0_19] : memref<8x1xf32, #tpu.memory_space<vmem>>, vector<8x1xf32>
    tpu.vector_store %arg6[%c0_18, %c0_19], %32 {strides = array<i32>} : memref<8x1xf32, #tpu.memory_space<vmem>>, vector<8x1xf32>,
    %c0_20 = arith.constant 0 : index
    %c0_21 = arith.constant 0 : index
    %34 = vector.load %arg7[%c0_20, %c0_21] : memref<8x1xf32, #tpu.memory_space<vmem>>, vector<8x1xf32>
    %35 = arith.mulf %19, %19 : vector<8x256xf32>
    %cst_22 = arith.constant dense<0.000000e+00> : vector<8xf32>
    %36 = vector.multi_reduction <add>, %35, %cst_22 [1] : vector<8x256xf32> to vector<8xf32>
    %37 = vector.shape_cast %36 : vector<8xf32> to vector<8x1xf32>
    %38 = arith.addf %34, %37 : vector<8x1xf32>
    %c0_23 = arith.constant 0 : index
    %c0_24 = arith.constant 0 : index
    %39 = vector.load %arg7[%c0_23, %c0_24] : memref<8x1xf32, #tpu.memory_space<vmem>>, vector<8x1xf32>
    tpu.vector_store %arg7[%c0_23, %c0_24], %38 {strides = array<i32>} : memref<8x1xf32, #tpu.memory_space<vmem>>, vector<8x1xf32>,
    %c3_i32 = arith.constant 3 : i32
    %40 = arith.cmpi eq, %arg0, %c3_i32 : i32
    %41 = arith.extui %40 : i1 to i32
    %c0_i32_25 = arith.constant 0 : i32
    %42 = arith.cmpi ne, %41, %c0_i32_25 : i32
    scf.if %42 {
      %c0_26 = arith.constant 0 : index
      %c0_27 = arith.constant 0 : index
      %43 = vector.load %arg4[%c0_26, %c0_27] : memref<8x8xf32, #tpu.memory_space<vmem>>, vector<8x8xf32>
      %c0_28 = arith.constant 0 : index
      %c0_29 = arith.constant 0 : index
      %44 = vector.load %arg5[%c0_28, %c0_29] : memref<8x8xf32, #tpu.memory_space<vmem>>, vector<8x8xf32>
      %45 = tpu.iota {dimensions = array<i32: 0>} : vector<8x8xi32>
      %46 = tpu.iota {dimensions = array<i32: 1>} : vector<8x8xi32>
      %47 = arith.cmpi eq, %45, %46 : vector<8x8xi32>
      %c4_i32_30 = arith.constant 4 : i32
      %48 = vector.broadcast %c4_i32_30 : i32 to vector<8x8xi32>
      %49 = arith.cmpi slt, %45, %48 : vector<8x8xi32>
      %c4_i32_31 = arith.constant 4 : i32
      %50 = vector.broadcast %c4_i32_31 : i32 to vector<8x8xi32>
      %51 = arith.cmpi slt, %46, %50 : vector<8x8xi32>
      %52 = arith.andi %49, %51 : vector<8x8xi1>
      %cst_32 = arith.constant dense<true> : vector<8x8xi1>
      %53 = arith.xori %47, %cst_32 : vector<8x8xi1>
      %54 = arith.andi %52, %53 : vector<8x8xi1>
      %c0_33 = arith.constant 0 : index
      %c0_34 = arith.constant 0 : index
      %55 = vector.load %arg6[%c0_33, %c0_34] : memref<8x1xf32, #tpu.memory_space<vmem>>, vector<8x1xf32>
      %cst_35 = arith.constant 0.000000e+00 : f32
      %56 = vector.broadcast %cst_35 : f32 to vector<8x8xf32>
      %57 = arith.select %47, %43, %56 : vector<8x8xi1>, vector<8x8xf32>
      %cst_36 = arith.constant dense<0.000000e+00> : vector<8xf32>
      %58 = vector.multi_reduction <add>, %57, %cst_36 [0] : vector<8x8xf32> to vector<8xf32>
      %59 = vector.shape_cast %58 : vector<8xf32> to vector<1x8xf32>
      %60 = vector.broadcast %55 : vector<8x1xf32> to vector<8x8xf32>
      %61 = vector.broadcast %59 : vector<1x8xf32> to vector<8x8xf32>
      %62 = arith.addf %60, %61 : vector<8x8xf32>
      %cst_37 = arith.constant 2.000000e+00 : f32
      %63 = vector.broadcast %cst_37 : f32 to vector<8x8xf32>
      %64 = arith.mulf %63, %43 : vector<8x8xf32>
      %65 = arith.subf %62, %64 : vector<8x8xf32>
      %cst_38 = arith.constant 9.99999996E-13 : f32
      %66 = vector.broadcast %cst_38 : f32 to vector<8x8xf32>
      %67 = arith.maximumf %65, %66 : vector<8x8xf32>
      %68 = math.sqrt %67 : vector<8x8xf32>
      %cst_39 = arith.constant 0.000000e+00 : f32
      %69 = vector.broadcast %cst_39 : f32 to vector<8x8xf32>
      %70 = arith.select %54, %68, %69 : vector<8x8xi1>, vector<8x8xf32>
      %71 = math.rsqrt %67 : vector<8x8xf32>
      %cst_40 = arith.constant 0.000000e+00 : f32
      %72 = vector.broadcast %cst_40 : f32 to vector<8x8xf32>
      %73 = arith.select %54, %71, %72 : vector<8x8xi1>, vector<8x8xf32>
      %cst_41 = arith.constant 0.000000e+00 : f32
      %74 = vector.broadcast %cst_41 : f32 to vector<8x8xf32>
      %75 = arith.cmpf ogt, %70, %74 : vector<8x8xf32>
      %76 = arith.extui %75 : vector<8x8xi1> to vector<8x8xi32>
      %77 = arith.sitofp %76 : vector<8x8xi32> to vector<8x8xf32>
      %78 = vector.shape_cast %77 : vector<8x8xf32> to vector<1x8x8xf32>
      %cst_42 = arith.constant dense<0.000000e+00> : vector<1xf32>
      %79 = vector.multi_reduction <add>, %78, %cst_42 [1, 2] : vector<1x8x8xf32> to vector<1xf32>
      %80 = vector.shape_cast %79 : vector<1xf32> to vector<1x1x1xf32>
      %81 = vector.extract %80[0, 0, 0] : f32 from vector<1x1x1xf32>
      %cst_43 = arith.constant 1.000000e+00 : f32
      %82 = arith.maximumf %81, %cst_43 : f32
      %cst_44 = arith.constant 0.000000e+00 : f32
      %83 = vector.broadcast %cst_44 : f32 to vector<8x8xf32>
      %84 = arith.select %75, %70, %83 : vector<8x8xi1>, vector<8x8xf32>
      %85 = vector.shape_cast %84 : vector<8x8xf32> to vector<1x8x8xf32>
      %cst_45 = arith.constant dense<0.000000e+00> : vector<1xf32>
      %86 = vector.multi_reduction <add>, %85, %cst_45 [1, 2] : vector<1x8x8xf32> to vector<1xf32>
      %87 = vector.shape_cast %86 : vector<1xf32> to vector<1x1x1xf32>
      %88 = vector.extract %87[0, 0, 0] : f32 from vector<1x1x1xf32>
      %89 = vector.broadcast %88 : f32 to vector<1x1xf32>
      %90 = tpu.reciprocal %89 {approx = true} : vector<1x1xf32> -> vector<1x1xf32>
      %91 = vector.broadcast %82 : f32 to vector<1x1xf32>
      %92 = arith.mulf %91, %90 : vector<1x1xf32>
      %93 = vector.broadcast %92 : vector<1x1xf32> to vector<8x8xf32>
      %94 = arith.mulf %70, %93 : vector<8x8xf32>
      %c0_46 = arith.constant 0 : index
      %c0_47 = arith.constant 0 : index
      %95 = vector.load %arg7[%c0_46, %c0_47] : memref<8x1xf32, #tpu.memory_space<vmem>>, vector<8x1xf32>
      %cst_48 = arith.constant 0.000000e+00 : f32
      %96 = vector.broadcast %cst_48 : f32 to vector<8x8xf32>
      %97 = arith.select %47, %44, %96 : vector<8x8xi1>, vector<8x8xf32>
      %cst_49 = arith.constant dense<0.000000e+00> : vector<8xf32>
      %98 = vector.multi_reduction <add>, %97, %cst_49 [0] : vector<8x8xf32> to vector<8xf32>
      %99 = vector.shape_cast %98 : vector<8xf32> to vector<1x8xf32>
      %100 = vector.broadcast %95 : vector<8x1xf32> to vector<8x8xf32>
      %101 = vector.broadcast %99 : vector<1x8xf32> to vector<8x8xf32>
      %102 = arith.addf %100, %101 : vector<8x8xf32>
      %cst_50 = arith.constant 2.000000e+00 : f32
      %103 = vector.broadcast %cst_50 : f32 to vector<8x8xf32>
      %104 = arith.mulf %103, %44 : vector<8x8xf32>
      %105 = arith.subf %102, %104 : vector<8x8xf32>
      %cst_51 = arith.constant 9.99999996E-13 : f32
      %106 = vector.broadcast %cst_51 : f32 to vector<8x8xf32>
      %107 = arith.maximumf %105, %106 : vector<8x8xf32>
      %108 = math.sqrt %107 : vector<8x8xf32>
      %cst_52 = arith.constant 0.000000e+00 : f32
      %109 = vector.broadcast %cst_52 : f32 to vector<8x8xf32>
      %110 = arith.select %54, %108, %109 : vector<8x8xi1>, vector<8x8xf32>
      %111 = math.rsqrt %107 : vector<8x8xf32>
      %cst_53 = arith.constant 0.000000e+00 : f32
      %112 = vector.broadcast %cst_53 : f32 to vector<8x8xf32>
      %113 = arith.select %54, %111, %112 : vector<8x8xi1>, vector<8x8xf32>
      %cst_54 = arith.constant 0.000000e+00 : f32
      %114 = vector.broadcast %cst_54 : f32 to vector<8x8xf32>
      %115 = arith.cmpf ogt, %110, %114 : vector<8x8xf32>
      %116 = arith.extui %115 : vector<8x8xi1> to vector<8x8xi32>
      %117 = arith.sitofp %116 : vector<8x8xi32> to vector<8x8xf32>
      %118 = vector.shape_cast %117 : vector<8x8xf32> to vector<1x8x8xf32>
      %cst_55 = arith.constant dense<0.000000e+00> : vector<1xf32>
      %119 = vector.multi_reduction <add>, %118, %cst_55 [1, 2] : vector<1x8x8xf32> to vector<1xf32>
      %120 = vector.shape_cast %119 : vector<1xf32> to vector<1x1x1xf32>
      %121 = vector.extract %120[0, 0, 0] : f32 from vector<1x1x1xf32>
      %cst_56 = arith.constant 1.000000e+00 : f32
      %122 = arith.maximumf %121, %cst_56 : f32
      %cst_57 = arith.constant 0.000000e+00 : f32
      %123 = vector.broadcast %cst_57 : f32 to vector<8x8xf32>
      %124 = arith.select %115, %110, %123 : vector<8x8xi1>, vector<8x8xf32>
      %125 = vector.shape_cast %124 : vector<8x8xf32> to vector<1x8x8xf32>
      %cst_58 = arith.constant dense<0.000000e+00> : vector<1xf32>
      %126 = vector.multi_reduction <add>, %125, %cst_58 [1, 2] : vector<1x8x8xf32> to vector<1xf32>
      %127 = vector.shape_cast %126 : vector<1xf32> to vector<1x1x1xf32>
      %128 = vector.extract %127[0, 0, 0] : f32 from vector<1x1x1xf32>
      %129 = vector.broadcast %128 : f32 to vector<1x1xf32>
      %130 = tpu.reciprocal %129 {approx = true} : vector<1x1xf32> -> vector<1x1xf32>
      %131 = vector.broadcast %122 : f32 to vector<1x1xf32>
      %132 = arith.mulf %131, %130 : vector<1x1xf32>
      %133 = vector.broadcast %132 : vector<1x1xf32> to vector<8x8xf32>
      %134 = arith.mulf %110, %133 : vector<8x8xf32>
      %135 = arith.subf %94, %134 : vector<8x8xf32>
      %136 = math.absf %135 : vector<8x8xf32>
      %cst_59 = arith.constant 1.000000e+00 : f32
      %137 = vector.broadcast %cst_59 : f32 to vector<8x8xf32>
      %138 = arith.cmpf olt, %136, %137 : vector<8x8xf32>
      %cst_60 = arith.constant 5.000000e-01 : f32
      %139 = vector.broadcast %cst_60 : f32 to vector<8x8xf32>
      %140 = arith.mulf %139, %136 : vector<8x8xf32>
      %141 = arith.mulf %140, %136 : vector<8x8xf32>
      %cst_61 = arith.constant 5.000000e-01 : f32
      %142 = vector.broadcast %cst_61 : f32 to vector<8x8xf32>
      %143 = arith.subf %136, %142 : vector<8x8xf32>
      %144 = arith.select %138, %141, %143 : vector<8x8xi1>, vector<8x8xf32>
      %145 = vector.shape_cast %144 : vector<8x8xf32> to vector<1x8x8xf32>
      %cst_62 = arith.constant dense<0.000000e+00> : vector<1xf32>
      %146 = vector.multi_reduction <add>, %145, %cst_62 [1, 2] : vector<1x8x8xf32> to vector<1xf32>
      %147 = vector.shape_cast %146 : vector<1xf32> to vector<1x1x1xf32>
      %148 = vector.extract %147[0, 0, 0] : f32 from vector<1x1x1xf32>
      %cst_63 = arith.constant 6.250000e-02 : f32
      %149 = arith.mulf %148, %cst_63 : f32
      %c0_64 = arith.constant 0 : index
      %c0_65 = arith.constant 0 : index
      %150 = vector.load %arg8[%c0_64, %c0_65] : memref<8x8xf32, #tpu.memory_space<vmem>>, vector<8x8xf32>
      tpu.vector_store %arg8[%c0_64, %c0_65], %73 {strides = array<i32>} : memref<8x8xf32, #tpu.memory_space<vmem>>, vector<8x8xf32>,
      %c0_66 = arith.constant 0 : index
      %c0_67 = arith.constant 0 : index
      %151 = vector.load %arg9[%c0_66, %c0_67] : memref<8x8xf32, #tpu.memory_space<vmem>>, vector<8x8xf32>
      tpu.vector_store %arg9[%c0_66, %c0_67], %113 {strides = array<i32>} : memref<8x8xf32, #tpu.memory_space<vmem>>, vector<8x8xf32>,
      %cst_68 = arith.constant 0.000000e+00 : f32
      %152 = vector.broadcast %cst_68 : f32 to vector<8x8xf32>
      %c0_i32_69 = arith.constant 0 : i32
      %c4_i32_70 = arith.constant 4 : i32
      %153 = arith.addi %c0_i32_69, %c4_i32_70 : i32
      %c1_i32 = arith.constant 1 : i32
      %154 = scf.for %arg10 = %c0_i32_69 to %153 step %c1_i32 iter_args(%arg11 = %152) -> (vector<8x8xf32>)  : i32 {
        %164 = vector.broadcast %arg10 : i32 to vector<8x8xi32>
        %165 = arith.cmpi eq, %46, %164 : vector<8x8xi32>
        %166 = arith.index_cast %arg10 : i32 to index
        %c0_78 = arith.constant 0 : index
        %167 = vector.load %arg4[%166, %c0_78] : memref<8x8xf32, #tpu.memory_space<vmem>>, vector<1x8xf32>
        %168 = arith.index_cast %arg10 : i32 to index
        %c0_79 = arith.constant 0 : index
        %169 = vector.load %arg5[%168, %c0_79] : memref<8x8xf32, #tpu.memory_space<vmem>>, vector<1x8xf32>
        %170 = arith.index_cast %arg10 : i32 to index
        %c0_80 = arith.constant 0 : index
        %171 = vector.load %arg8[%170, %c0_80] : memref<8x8xf32, #tpu.memory_space<vmem>>, vector<1x8xf32>
        %172 = arith.index_cast %arg10 : i32 to index
        %c0_81 = arith.constant 0 : index
        %173 = vector.load %arg9[%172, %c0_81] : memref<8x8xf32, #tpu.memory_space<vmem>>, vector<1x8xf32>
        %174 = arith.index_cast %arg10 : i32 to index
        %c0_82 = arith.constant 0 : index
        %175 = vector.load %arg6[%174, %c0_82] : memref<8x1xf32, #tpu.memory_space<vmem>>, vector<1x1xf32>
        %176 = arith.index_cast %arg10 : i32 to index
        %c0_83 = arith.constant 0 : index
        %177 = vector.load %arg7[%176, %c0_83] : memref<8x1xf32, #tpu.memory_space<vmem>>, vector<1x1xf32>
        %cst_84 = arith.constant 0.000000e+00 : f32
        %178 = vector.broadcast %cst_84 : f32 to vector<8x8xf32>
        %179 = arith.select %165, %43, %178 : vector<8x8xi1>, vector<8x8xf32>
        %cst_85 = arith.constant dense<0.000000e+00> : vector<8xf32>
        %180 = vector.multi_reduction <add>, %179, %cst_85 [1] : vector<8x8xf32> to vector<8xf32>
        %181 = vector.shape_cast %180 : vector<8xf32> to vector<8x1xf32>
        %cst_86 = arith.constant 0.000000e+00 : f32
        %182 = vector.broadcast %cst_86 : f32 to vector<8x8xf32>
        %183 = arith.select %165, %44, %182 : vector<8x8xi1>, vector<8x8xf32>
        %cst_87 = arith.constant dense<0.000000e+00> : vector<8xf32>
        %184 = vector.multi_reduction <add>, %183, %cst_87 [1] : vector<8x8xf32> to vector<8xf32>
        %185 = vector.shape_cast %184 : vector<8xf32> to vector<8x1xf32>
        %cst_88 = arith.constant 0.000000e+00 : f32
        %186 = vector.broadcast %cst_88 : f32 to vector<8x8xf32>
        %187 = arith.select %165, %73, %186 : vector<8x8xi1>, vector<8x8xf32>
        %cst_89 = arith.constant dense<0.000000e+00> : vector<8xf32>
        %188 = vector.multi_reduction <add>, %187, %cst_89 [1] : vector<8x8xf32> to vector<8xf32>
        %189 = vector.shape_cast %188 : vector<8xf32> to vector<8x1xf32>
        %cst_90 = arith.constant 0.000000e+00 : f32
        %190 = vector.broadcast %cst_90 : f32 to vector<8x8xf32>
        %191 = arith.select %165, %113, %190 : vector<8x8xi1>, vector<8x8xf32>
        %cst_91 = arith.constant dense<0.000000e+00> : vector<8xf32>
        %192 = vector.multi_reduction <add>, %191, %cst_91 [1] : vector<8x8xf32> to vector<8xf32>
        %193 = vector.shape_cast %192 : vector<8xf32> to vector<8x1xf32>
        %194 = vector.broadcast %181 : vector<8x1xf32> to vector<8x8xf32>
        %195 = arith.subf %43, %194 : vector<8x8xf32>
        %196 = vector.broadcast %167 : vector<1x8xf32> to vector<8x8xf32>
        %197 = arith.subf %195, %196 : vector<8x8xf32>
        %198 = vector.broadcast %175 : vector<1x1xf32> to vector<8x8xf32>
        %199 = arith.addf %197, %198 : vector<8x8xf32>
        %200 = vector.broadcast %189 : vector<8x1xf32> to vector<8x8xf32>
        %201 = vector.broadcast %171 : vector<1x8xf32> to vector<8x8xf32>
        %202 = arith.mulf %200, %201 : vector<8x8xf32>
        %203 = arith.mulf %199, %202 : vector<8x8xf32>
        %204 = vector.broadcast %185 : vector<8x1xf32> to vector<8x8xf32>
        %205 = arith.subf %44, %204 : vector<8x8xf32>
        %206 = vector.broadcast %169 : vector<1x8xf32> to vector<8x8xf32>
        %207 = arith.subf %205, %206 : vector<8x8xf32>
        %208 = vector.broadcast %177 : vector<1x1xf32> to vector<8x8xf32>
        %209 = arith.addf %207, %208 : vector<8x8xf32>
        %210 = vector.broadcast %193 : vector<8x1xf32> to vector<8x8xf32>
        %211 = vector.broadcast %173 : vector<1x8xf32> to vector<8x8xf32>
        %212 = arith.mulf %210, %211 : vector<8x8xf32>
        %213 = arith.mulf %209, %212 : vector<8x8xf32>
        %214 = arith.subf %203, %213 : vector<8x8xf32>
        %215 = math.absf %214 : vector<8x8xf32>
        %cst_92 = arith.constant 1.000000e+00 : f32
        %216 = vector.broadcast %cst_92 : f32 to vector<8x8xf32>
        %217 = arith.cmpf olt, %215, %216 : vector<8x8xf32>
        %cst_93 = arith.constant 5.000000e-01 : f32
        %218 = vector.broadcast %cst_93 : f32 to vector<8x8xf32>
        %219 = arith.mulf %218, %215 : vector<8x8xf32>
        %220 = arith.mulf %219, %215 : vector<8x8xf32>
        %cst_94 = arith.constant 5.000000e-01 : f32
        %221 = vector.broadcast %cst_94 : f32 to vector<8x8xf32>
        %222 = arith.subf %215, %221 : vector<8x8xf32>
        %223 = arith.select %217, %220, %222 : vector<8x8xi1>, vector<8x8xf32>
        %224 = arith.addf %arg11, %223 : vector<8x8xf32>
        scf.yield %224 : vector<8x8xf32>
      }
      %c4_i32_71 = arith.constant 4 : i32
      %155 = vector.shape_cast %154 : vector<8x8xf32> to vector<1x8x8xf32>
      %cst_72 = arith.constant dense<0.000000e+00> : vector<1xf32>
      %156 = vector.multi_reduction <add>, %155, %cst_72 [1, 2] : vector<1x8x8xf32> to vector<1xf32>
      %157 = vector.shape_cast %156 : vector<1xf32> to vector<1x1x1xf32>
      %158 = vector.extract %157[0, 0, 0] : f32 from vector<1x1x1xf32>
      %cst_73 = arith.constant 1.562500e-02 : f32
      %159 = arith.mulf %158, %cst_73 : f32
      %cst_74 = arith.constant 1.000000e+00 : f32
      %160 = arith.mulf %cst_74, %149 : f32
      %cst_75 = arith.constant 2.000000e+00 : f32
      %161 = arith.mulf %cst_75, %159 : f32
      %162 = arith.addf %160, %161 : f32
      %c0_76 = arith.constant 0 : index
      %c0_77 = arith.constant 0 : index
      %163 = memref.load %arg3[%c0_76, %c0_77] : memref<1x1xf32, #tpu.memory_space<smem>>
      memref.store %162, %arg3[%c0_76, %c0_77] : memref<1x1xf32, #tpu.memory_space<smem>>
    } else {
    }
    return
  }
  func.func @transform_0(%arg0: i32) -> (i32, i32) {
    %c0_i32 = arith.constant 0 : i32
    %c0_i32_0 = arith.constant 0 : i32
    return %c0_i32, %arg0 : i32, i32
  }
  func.func @transform_1(%arg0: i32) -> (i32, i32) {
    %c0_i32 = arith.constant 0 : i32
    %c0_i32_0 = arith.constant 0 : i32
    return %c0_i32, %arg0 : i32, i32
  }
  func.func @transform_2(%arg0: i32) -> (i32, i32) {
    %c0_i32 = arith.constant 0 : i32
    %c0_i32_0 = arith.constant 0 : i32
    %c0_i32_1 = arith.constant 0 : i32
    return %c0_i32, %c0_i32_0 : i32, i32
  }
}

</mosaic_0001>

<llo_original>
// kernel: tpu_custom_call.1
$region0: #{tpu_custom_call.1}
  #allocation0 [shape = 'u32[]', space=smem, size = 0x4, offset = 0x4, fixed_abs, tag = 'smem constant byte address 0x4 - core index']
  #allocation1 [shape = 'u32[144,128]{1,0:T(1,128)}', space=vmem, size = 0x12000, scoped, tag = 'internal scratch']
  #allocation2 [shape = 'f32[8,8]{1,0:T(8,128)}', space=vmem, size = 0x1000, scoped, tag = 'scratch operand']
  #allocation3 [shape = 'f32[8,8]{1,0:T(8,128)}', space=vmem, size = 0x1000, scoped, tag = 'scratch operand']
  #allocation4 [shape = 'f32[8,1]{1,0:T(8,128)}', space=vmem, size = 0x1000, scoped, tag = 'scratch operand']
  #allocation5 [shape = 'f32[8,1]{1,0:T(8,128)}', space=vmem, size = 0x1000, scoped, tag = 'scratch operand']
  #allocation6 [shape = 'f32[8,8]{1,0:T(8,128)}', space=vmem, size = 0x1000, scoped, tag = 'scratch operand']
  #allocation7 [shape = 'f32[8,8]{1,0:T(8,128)}', space=vmem, size = 0x1000, scoped, tag = 'scratch operand']
  %s0 = inlined_call_operand.hbm [shape: f32[4,800], index: 0, kind: input, shape index: {}]
  %s1 = inlined_call_operand.hbm [shape: f32[4,800], index: 1, kind: input, shape index: {}]
  %s2 = inlined_call_operand.hbm [shape: f32[1,1], index: 2, kind: output, shape index: {}]
  %s3 = sld [smem:[#allocation0]]
  $region64: #{tpu_custom_call.1} parent=0
    _
  %s5 = ssub.s32 1, %s3
  %s6 = scalar_select 0, %s5, %s3
  $region1: #{tpu_custom_call.1} parent=0
    #allocation8 [shape = 'u8[16384]{0}', space=vmem, size = 0x4000, scoped, tag = 'input window, operand 0']
    #allocation9 [shape = 's32[2]{0}', space=sflag, size = 0x8, scoped, tag = 'scoped memory for tpu_custom_call.1']
    #allocation10 [shape = 's32[2]{0}', space=sflag, size = 0x8, scoped, tag = 'scoped memory for tpu_custom_call.1']
    #allocation11 [shape = 'u8[16384]{0}', space=vmem, size = 0x4000, scoped, tag = 'input window, operand 1']
    #allocation12 [shape = 's32[2]{0}', space=sflag, size = 0x8, scoped, tag = 'scoped memory for tpu_custom_call.1']
    #allocation13 [shape = 'u8[512]{0}', space=smem, size = 0x200, scoped, tag = 'output window, operand 0, single buffered']
    %7 = vsyncpa [#allocation9], 0
    %s8 = scalar_lea.sflag [#allocation9], 1
    %9 = vsyncpa %s8, 0
    %10 = vsyncpa [#allocation12], 0
    %s11 = scalar_lea.sflag [#allocation12], 1
    %12 = vsyncpa %s11, 0
    %13 = vsyncpa [#allocation10], 0
    loop: start=0, step=1, limit=6
    $region2: #{tpu_custom_call.1} parent=1 // loop_pre_header
      _
    $region3: #{tpu_custom_call.1} parent=1 // loop_header
      %s15 = sphi 0, %s19
      %p16 = scmp.ge.s32.totalorder %s15, 6
      %s25 = sphi 0, %s27
      %s28 = sphi 0, %s25
      %s29 = sphi 0, %s28
      %s45 = sphi 0, %s29
      %s51 = sphi 0, %s53
      %s54 = sphi 0, %s51
      %s55 = sphi 0, %s54
      %s71 = sphi 0, %s55
      %s75 = sphi 0, %s75
      %s77 = sphi 0, %s75
      %s78 = sphi 0, %s77
      %s92 = sphi 0, %s78
    $region4: #{tpu_custom_call.1} parent=1 // loop_header_branch
      %18 = sbr.rel (%p16) target = $region8
    $region5: #{tpu_custom_call.1} parent=1 // loop_body
      %s20 = ssub.s32 %s15, 1
      %s21 = ssub.s32 %s15, 2
      %s22 = sadd.s32 %s15, 1
      %s23 = ssub.s32 %s15, %s22
      %p24 = scmp.eq.s32.totalorder %s23, 0
      %s26 = sadd.s32 %s25, 1
      %s27 = scalar_select %p24, %s25, %s26
      %p30 = pneg %p24
      %p31 = scmp.eq.s32.totalorder %s15, 3
      %p32 = por %p30, %p31
      %p33 = scmp.ne.s32.totalorder %s25, %s28
      %p34 = scmp.eq.s32.totalorder %s15, 0
      %p35 = por %p33, %p34
      %p36 = scmp.ne.s32.totalorder %s25, %s28
      %p37 = scmp.eq.s32.totalorder %s20, 3
      %p38 = por %p36, %p37
      %p39 = scmp.ne.s32.totalorder %s28, %s29
      %p40 = scmp.eq.s32.totalorder %s20, 0
      %p41 = por %p39, %p40
      %p42 = scmp.ne.s32.totalorder %s28, %s29
      %p43 = scmp.eq.s32.totalorder %s21, 3
      %p44 = por %p42, %p43
      %p46 = scmp.ne.s32.totalorder %s29, %s45
      %p47 = scmp.eq.s32.totalorder %s21, 0
      %p48 = por %p46, %p47
      %s49 = ssub.s32 %s15, %s22
      %p50 = scmp.eq.s32.totalorder %s49, 0
      %s52 = sadd.s32 %s51, 1
      %s53 = scalar_select %p50, %s51, %s52
      %p56 = pneg %p50
      %p57 = scmp.eq.s32.totalorder %s15, 3
      %p58 = por %p56, %p57
      %p59 = scmp.ne.s32.totalorder %s51, %s54
      %p60 = scmp.eq.s32.totalorder %s15, 0
      %p61 = por %p59, %p60
      %p62 = scmp.ne.s32.totalorder %s51, %s54
      %p63 = scmp.eq.s32.totalorder %s20, 3
      %p64 = por %p62, %p63
      %p65 = scmp.ne.s32.totalorder %s54, %s55
      %p66 = scmp.eq.s32.totalorder %s20, 0
      %p67 = por %p65, %p66
      %p68 = scmp.ne.s32.totalorder %s54, %s55
      %p69 = scmp.eq.s32.totalorder %s21, 3
      %p70 = por %p68, %p69
      %p72 = scmp.ne.s32.totalorder %s55, %s71
      %p73 = scmp.eq.s32.totalorder %s21, 0
      %p74 = por %p72, %p73
      %s76 = sadd.s32 %s75, 1
      %p79 = scmp.eq.s32.totalorder %s15, 3
      %p80 = scmp.ne.s32.totalorder %s75, %s77
      %p81 = scmp.eq.s32.totalorder %s15, 0
      %p82 = por %p80, %p81
      %p83 = scmp.ne.s32.totalorder %s75, %s77
      %p84 = scmp.eq.s32.totalorder %s20, 3
      %p85 = por %p83, %p84
      %p86 = scmp.ne.s32.totalorder %s77, %s78
      %p87 = scmp.eq.s32.totalorder %s20, 0
      %p88 = por %p86, %p87
      %p89 = scmp.ne.s32.totalorder %s77, %s78
      %p90 = scmp.eq.s32.totalorder %s21, 3
      %p91 = por %p89, %p90
      %p93 = scmp.ne.s32.totalorder %s78, %s92
      %p94 = scmp.eq.s32.totalorder %s21, 0
      %p95 = por %p93, %p94
      %p96 = scmp.le.s32.totalorder 1, %s15
      %p97 = scmp.lt.s32.totalorder %s15, 5
      %p98 = pnand %p96, %p97
      %p99 = pneg %p98
      // Predicated region
      $region9: #{tpu_custom_call.1} parent=5 // pred_check
        _
      $region10: #{tpu_custom_call.1} parent=5 // pred_check_branch
        %101 = sbr.rel (%p98) target = $region12
      $region11: #{tpu_custom_call.1} parent=5 // pred_region
        %s102 = ssub.s32 %s15, 1
      $region12: #{tpu_custom_call.1} parent=5 // pred_fallthru
        _
      %p103 = scmp.lt.s32.totalorder %s15, 4
      // Predicated region
      $region13: #{tpu_custom_call.1} parent=5 // pred_check
        %p104 = pneg %p103
      $region14: #{tpu_custom_call.1} parent=5 // pred_check_branch
        %106 = sbr.rel (%p104) target = $region16
      $region15: #{tpu_custom_call.1} parent=5 // pred_region
        // Predicated region
        $region17: #{tpu_custom_call.1} parent=15 // pred_check
          %p107 = pneg %p35
        $region18: #{tpu_custom_call.1} parent=15 // pred_check_branch
          %109 = sbr.rel (%p107) target = $region20
        $region19: #{tpu_custom_call.1} parent=15 // pred_region
          %s110 = sand.u32 %s25, 1
          %s111 = scalar_lea.sflag [#allocation9], %s110
          %s112 = sand.u32 %s25, 1
          %s113 = smul.addr %s112, 16
          %s114 = scalar_lea.vmem [#allocation8], %s113
          %s115 = smul.u32 2, %s15
          %s116 = ssub.s32 7, %s115
          %p117 = scmp.lt.s32.totalorder %s116, 2
          %s118 = scalar_select %p117, %s116, 2
          %s119 = smul.u32 64, %s118
          %s121 = ssub.s32 256, %s119
          %122 = vsyncadd %s111, %s121
          %p123 = scmp.ne.s32.totalorder 0, %s119
          %s124 = smul.addr %s115, 64
          %s125 = scalar_lea.hbm %s0, %s124
          %s126 = smul.u32 %s118, 4
          %s127 = sshll.u32 %s114, 4
          %s128 = int_to_ptr.vmem [resolvable:$true] %s127
          %s129 = sshll.u32 %s126, 4
          %133 = dma.hbm_to_vmem [thread:$0]  (%p123), %s125, %s129, %s128, %s111, 448, 128, %s126
        $region20: #{tpu_custom_call.1} parent=15 // pred_fallthru
          _
        // Predicated region
        $region21: #{tpu_custom_call.1} parent=15 // pred_check
          %p134 = pneg %p61
        $region22: #{tpu_custom_call.1} parent=15 // pred_check_branch
          %136 = sbr.rel (%p134) target = $region24
        $region23: #{tpu_custom_call.1} parent=15 // pred_region
          %s137 = sand.u32 %s51, 1
          %s138 = scalar_lea.sflag [#allocation12], %s137
          %s139 = sand.u32 %s51, 1
          %s140 = smul.addr %s139, 16
          %s141 = scalar_lea.vmem [#allocation11], %s140
          %s142 = smul.u32 2, %s15
          %s143 = ssub.s32 7, %s142
          %p144 = scmp.lt.s32.totalorder %s143, 2
          %s145 = scalar_select %p144, %s143, 2
          %s146 = smul.u32 64, %s145
          %s148 = ssub.s32 256, %s146
          %149 = vsyncadd %s138, %s148
          %p150 = scmp.ne.s32.totalorder 0, %s146
          %s151 = smul.addr %s142, 64
          %s152 = scalar_lea.hbm %s1, %s151
          %s153 = smul.u32 %s145, 4
          %s154 = sshll.u32 %s141, 4
          %s155 = int_to_ptr.vmem [resolvable:$true] %s154
          %s156 = sshll.u32 %s153, 4
          %160 = dma.hbm_to_vmem [thread:$0]  (%p150), %s152, %s156, %s155, %s138, 448, 128, %s153
        $region24: #{tpu_custom_call.1} parent=15 // pred_fallthru
          _
      $region16: #{tpu_custom_call.1} parent=5 // pred_fallthru
        _
      %p161 = scmp.le.s32.totalorder 1, %s15
      %p162 = scmp.lt.s32.totalorder %s15, 5
      %p163 = pnand %p161, %p162
      %p164 = pneg %p163
      // Predicated region
      $region25: #{tpu_custom_call.1} parent=5 // pred_check
        _
      $region26: #{tpu_custom_call.1} parent=5 // pred_check_branch
        %166 = sbr.rel (%p163) target = $region28
      $region27: #{tpu_custom_call.1} parent=5 // pred_region
        %s167 = ssub.s32 %s15, 1
        %s168 = sand.u32 %s28, 1
        %s169 = scalar_lea.sflag [#allocation9], %s168
        %s170 = sand.u32 %s28, 1
        %s171 = smul.addr %s170, 16
        %s172 = scalar_lea.vmem [#allocation8], %s171
        // Predicated region
        $region29: #{tpu_custom_call.1} parent=27 // pred_check
          %p173 = pneg %p41
        $region30: #{tpu_custom_call.1} parent=27 // pred_check_branch
          %175 = sbr.rel (%p173) target = $region32
        $region31: #{tpu_custom_call.1} parent=27 // pred_region
          %176 = dma.done %s169, 256
        $region32: #{tpu_custom_call.1} parent=27 // pred_fallthru
          _
        %s177 = sand.u32 %s54, 1
        %s178 = scalar_lea.sflag [#allocation12], %s177
        %s179 = sand.u32 %s54, 1
        %s180 = smul.addr %s179, 16
        %s181 = scalar_lea.vmem [#allocation11], %s180
        // Predicated region
        $region33: #{tpu_custom_call.1} parent=27 // pred_check
          %p182 = pneg %p67
        $region34: #{tpu_custom_call.1} parent=27 // pred_check_branch
          %184 = sbr.rel (%p182) target = $region36
        $region35: #{tpu_custom_call.1} parent=27 // pred_region
          %185 = dma.done %s178, 256
        $region36: #{tpu_custom_call.1} parent=27 // pred_fallthru
          _
        %s186 = sand.u32 %s28, 1
        %s187 = scalar_lea.sflag [#allocation9], %s186
        %s188 = sand.u32 %s28, 1
        %s189 = smul.addr %s188, 16
        %s190 = scalar_lea.vmem [#allocation8], %s189
        %p191 = pneg %p41
        %p192 = pneg %p38
        %s193 = sand.u32 %s54, 1
        %s194 = scalar_lea.sflag [#allocation12], %s193
        %s195 = sand.u32 %s54, 1
        %s196 = smul.addr %s195, 16
        %s197 = scalar_lea.vmem [#allocation11], %s196
        %p198 = pneg %p67
        %p199 = pneg %p64
        %p200 = pneg %p88
        %p201 = pneg %p85
        %s202 = smul.u32 2, %s20
        %s203 = ssub.s32 7, %s202
        %p204 = scmp.lt.s32.totalorder %s203, 2
        %s205 = scalar_select %p204, %s203, 2
        %s206 = smul.u32 64, %s205
        %s207 = smul.u32 2, %s20
        %s208 = ssub.s32 7, %s207
        %p209 = scmp.lt.s32.totalorder %s208, 2
        %s210 = scalar_select %p209, %s208, 2
        %s211 = smul.u32 64, %s210
        %p212 = scmp.eq.s32.totalorder %s20, 0
        // Predicated region
        $region37: #{tpu_custom_call.1} parent=27 // pred_check
          %p213 = pneg %p212
        $region38: #{tpu_custom_call.1} parent=27 // pred_check_branch
          %215 = sbr.rel (%p213) target = $region40
        $region39: #{tpu_custom_call.1} parent=27 // pred_region
          %vm216 = vcmask 64512
          %217 = vst.msk [vmem:[#allocation2] sm:$0xff] %vm216, 0.0
          %218 = vst.msk [vmem:[#allocation3] sm:$0xff] %vm216, 0.0
          %vm219 = vcmask 7168
          %220 = vst.msk [vmem:[#allocation4] sm:$0xff] %vm219, 0.0
          %221 = vst.msk [vmem:[#allocation5] sm:$0xff] %vm219, 0.0
        $region40: #{tpu_custom_call.1} parent=27 // pred_fallthru
          _
        %v222 = vld [vmem:[%s172] sm:$0xff]
        %v223 = vld [vmem:[%s172 + $0x8] sm:$0xff]
        %v224 = vld [vmem:[%s181] sm:$0xff]
        %v225 = vld [vmem:[%s181 + $0x8] sm:$0xff]
        %v226 = vlaneseq
        %v227 = vshrl.u32 %v226, 7
        %vm228 = vcmp.lt.s32.totalorder %v227, 4
        %v229 = vlaneseq
        %v230 = vand.u32 %v229, 127
        %v231 = vadd.s32 %v230, 128
        %s232 = smul.u32 %s20, 256
        %s233 = ssub.s32 800, %s232
        %v234 = vstv %s233
        %vm235 = vcmp.lt.s32.totalorder %v230, %v234
        %vm236 = vcmp.lt.s32.totalorder %v231, %v234
        %vm237 = vmand %vm228, %vm235
        %vm238 = vmand %vm228, %vm236
        %v241 = vcombine.low %v222, %v223
        %v242 = vcombine.high %v222, %v223
        %v245 = vsel %vm237, %v241, 0.0
        %v246 = vsel %vm238, %v242, 0.0
        %v249 = vcombine.low %v224, %v225
        %v250 = vcombine.high %v224, %v225
        %v253 = vsel %vm237, %v249, 0.0
        %v254 = vsel %vm238, %v250, 0.0
        %v255 = vld [vmem:[#allocation2] sm:$0xff]
        %256 = vmatprep.subr.mxu0 %v246
        %257 = vmatpush1.xpose.msra.mxu0 %v245
        %258 = vmatprep.subr.mxu0 0.0
        %259 = vmatpush1.xpose.msra.mxu0 0.0
        %260 = vmatprep.subr.mxu0 0.0
        %261 = vmatpush1.xpose.msra.mxu0 0.0
        %262 = vmatprep.subr.mxu0 0.0
        %263 = vmatpush1.xpose.msra.mxu0 0.0
        %264 = vmatprep.subr.mxu0 0.0
        %265 = vmatpush1.xpose.msra.mxu0 0.0
        %266 = vmatprep.subr.mxu0 0.0
        %267 = vmatpush1.xpose.msra.mxu0 0.0
        %268 = vmatprep.subr.mxu0 0.0
        %269 = vmatpush1.xpose.msra.mxu0 0.0
        %270 = vmatprep.subr.mxu0 0.0
        %271 = vmatpush1.xpose.msra.mxu0 0.0
        %272 = vmatprep.subr.mxu0 0.0
        %273 = vmatpush1.xpose.msra.mxu0 0.0
        %274 = vmatprep.subr.mxu0 0.0
        %275 = vmatpush1.xpose.msra.mxu0 0.0
        %276 = vmatprep.subr.mxu0 0.0
        %277 = vmatpush1.xpose.msra.mxu0 0.0
        %278 = vmatprep.subr.mxu0 0.0
        %279 = vmatpush1.xpose.msra.mxu0 0.0
        %280 = vmatprep.subr.mxu0 0.0
        %281 = vmatpush1.xpose.msra.mxu0 0.0
        %282 = vmatprep.subr.mxu0 0.0
        %283 = vmatpush1.xpose.msra.mxu0 0.0
        %284 = vmatprep.subr.mxu0 0.0
        %285 = vmatpush1.xpose.msra.mxu0 0.0
        %286 = vmatprep.subr.mxu0 0.0
        %287 = vmatpush1.xpose.msra.mxu0 0.0
        %288 = vmatprep.subr.mxu0 0.0
        %289 = vmatpush1.xpose.msra.mxu0 0.0
        %290 = vmatprep.subr.mxu0 0.0
        %291 = vmatpush1.xpose.msra.mxu0 0.0
        %292 = vmatprep.subr.mxu0 0.0
        %293 = vmatpush1.xpose.msra.mxu0 0.0
        %294 = vmatprep.subr.mxu0 0.0
        %295 = vmatpush1.xpose.msra.mxu0 0.0
        %296 = vmatprep.subr.mxu0 0.0
        %297 = vmatpush1.xpose.msra.mxu0 0.0
        %298 = vmatprep.subr.mxu0 0.0
        %299 = vmatpush1.xpose.msra.mxu0 0.0
        %300 = vmatprep.subr.mxu0 0.0
        %301 = vmatpush1.xpose.msra.mxu0 0.0
        %302 = vmatprep.subr.mxu0 0.0
        %303 = vmatpush1.xpose.msra.mxu0 0.0
        %304 = vmatprep.subr.mxu0 0.0
        %305 = vmatpush1.xpose.msra.mxu0 0.0
        %306 = vmatprep.subr.mxu0 0.0
        %307 = vmatpush1.xpose.msra.mxu0 0.0
        %308 = vmatprep.subr.mxu0 0.0
        %309 = vmatpush1.xpose.msra.mxu0 0.0
        %310 = vmatprep.subr.mxu0 0.0
        %311 = vmatpush1.xpose.msra.mxu0 0.0
        %312 = vmatprep.subr.mxu0 0.0
        %313 = vmatpush1.xpose.msra.mxu0 0.0
        %314 = vmatprep.subr.mxu0 0.0
        %315 = vmatpush1.xpose.msra.mxu0 0.0
        %316 = vmatprep.subr.mxu0 0.0
        %317 = vmatpush1.xpose.msra.mxu0 0.0
        %318 = vmatprep.subr.mxu0 0.0
        %319 = vmatpush1.xpose.msra.mxu0 0.0
        %320 = vmatprep.mubr.f32.mxu0 %v246
        %321 = vmatmul.mubr.f32.gmra.mrb[0].mxu0 %v245
        %v322 = vpop.f32.mrb[0].mxu0
        %v323 = vadd.f32 0.0, %v322
        %v324 = vpop.f32.mrb[0].mxu0
        %325 = vdwg.mxu0
        %v326 = vadd.f32 %v255, %v323
        %vm327 = vcmask 64512
        %328 = vst.msk [vmem:[#allocation2] sm:$0xff] %vm327, %v326
        %v329 = vld [vmem:[#allocation3] sm:$0xff]
        %330 = vmatprep.subr.mxu0 %v254
        %331 = vmatpush1.xpose.msra.mxu0 %v253
        %332 = vmatprep.subr.mxu0 0.0
        %333 = vmatpush1.xpose.msra.mxu0 0.0
        %334 = vmatprep.subr.mxu0 0.0
        %335 = vmatpush1.xpose.msra.mxu0 0.0
        %336 = vmatprep.subr.mxu0 0.0
        %337 = vmatpush1.xpose.msra.mxu0 0.0
        %338 = vmatprep.subr.mxu0 0.0
        %339 = vmatpush1.xpose.msra.mxu0 0.0
        %340 = vmatprep.subr.mxu0 0.0
        %341 = vmatpush1.xpose.msra.mxu0 0.0
        %342 = vmatprep.subr.mxu0 0.0
        %343 = vmatpush1.xpose.msra.mxu0 0.0
        %344 = vmatprep.subr.mxu0 0.0
        %345 = vmatpush1.xpose.msra.mxu0 0.0
        %346 = vmatprep.subr.mxu0 0.0
        %347 = vmatpush1.xpose.msra.mxu0 0.0
        %348 = vmatprep.subr.mxu0 0.0
        %349 = vmatpush1.xpose.msra.mxu0 0.0
        %350 = vmatprep.subr.mxu0 0.0
        %351 = vmatpush1.xpose.msra.mxu0 0.0
        %352 = vmatprep.subr.mxu0 0.0
        %353 = vmatpush1.xpose.msra.mxu0 0.0
        %354 = vmatprep.subr.mxu0 0.0
        %355 = vmatpush1.xpose.msra.mxu0 0.0
        %356 = vmatprep.subr.mxu0 0.0
        %357 = vmatpush1.xpose.msra.mxu0 0.0
        %358 = vmatprep.subr.mxu0 0.0
        %359 = vmatpush1.xpose.msra.mxu0 0.0
        %360 = vmatprep.subr.mxu0 0.0
        %361 = vmatpush1.xpose.msra.mxu0 0.0
        %362 = vmatprep.subr.mxu0 0.0
        %363 = vmatpush1.xpose.msra.mxu0 0.0
        %364 = vmatprep.subr.mxu0 0.0
        %365 = vmatpush1.xpose.msra.mxu0 0.0
        %366 = vmatprep.subr.mxu0 0.0
        %367 = vmatpush1.xpose.msra.mxu0 0.0
        %368 = vmatprep.subr.mxu0 0.0
        %369 = vmatpush1.xpose.msra.mxu0 0.0
        %370 = vmatprep.subr.mxu0 0.0
        %371 = vmatpush1.xpose.msra.mxu0 0.0
        %372 = vmatprep.subr.mxu0 0.0
        %373 = vmatpush1.xpose.msra.mxu0 0.0
        %374 = vmatprep.subr.mxu0 0.0
        %375 = vmatpush1.xpose.msra.mxu0 0.0
        %376 = vmatprep.subr.mxu0 0.0
        %377 = vmatpush1.xpose.msra.mxu0 0.0
        %378 = vmatprep.subr.mxu0 0.0
        %379 = vmatpush1.xpose.msra.mxu0 0.0
        %380 = vmatprep.subr.mxu0 0.0
        %381 = vmatpush1.xpose.msra.mxu0 0.0
        %382 = vmatprep.subr.mxu0 0.0
        %383 = vmatpush1.xpose.msra.mxu0 0.0
        %384 = vmatprep.subr.mxu0 0.0
        %385 = vmatpush1.xpose.msra.mxu0 0.0
        %386 = vmatprep.subr.mxu0 0.0
        %387 = vmatpush1.xpose.msra.mxu0 0.0
        %388 = vmatprep.subr.mxu0 0.0
        %389 = vmatpush1.xpose.msra.mxu0 0.0
        %390 = vmatprep.subr.mxu0 0.0
        %391 = vmatpush1.xpose.msra.mxu0 0.0
        %392 = vmatprep.subr.mxu0 0.0
        %393 = vmatpush1.xpose.msra.mxu0 0.0
        %394 = vmatprep.mubr.f32.mxu0 %v254
        %395 = vmatmul.mubr.f32.gmra.mrb[0].mxu0 %v253
        %v396 = vpop.f32.mrb[0].mxu0
        %v397 = vadd.f32 0.0, %v396
        %v398 = vpop.f32.mrb[0].mxu0
        %399 = vdwg.mxu0
        %v400 = vadd.f32 %v329, %v397
        %401 = vst.msk [vmem:[#allocation3] sm:$0xff] %vm327, %v400
        %v402 = vld [vmem:[#allocation4] sm:$0xff]
        %v403 = vmul.f32 %v245, %v245
        %v404 = vmul.f32 %v246, %v246
        %v405 = vadd.f32 %v403, %v404
        %406 = vadd.xlane.f32.xlu0 %v405
        %v407 = vpop.xlane.xlu0 %406
        %v408 = vadd.f32 %v402, %v407
        %vm409 = vcmask 7168
        %410 = vst.msk [vmem:[#allocation4] sm:$0xff] %vm409, %v408
        %v411 = vld [vmem:[#allocation5] sm:$0xff]
        %v412 = vmul.f32 %v253, %v253
        %v413 = vmul.f32 %v254, %v254
        %v414 = vadd.f32 %v412, %v413
        %415 = vadd.xlane.f32.xlu0 %v414
        %v416 = vpop.xlane.xlu0 %415
        %v417 = vadd.f32 %v411, %v416
        %418 = vst.msk [vmem:[#allocation5] sm:$0xff] %vm409, %v417
        %p419 = scmp.eq.s32.totalorder %s20, 3
        // Predicated region
        $region41: #{tpu_custom_call.1} parent=27 // pred_check
          %p420 = pneg %p419
        $region42: #{tpu_custom_call.1} parent=27 // pred_check_branch
          %422 = sbr.rel (%p420) target = $region44
        $region43: #{tpu_custom_call.1} parent=27 // pred_region
          %v423 = vld [vmem:[#allocation2] sm:$0xff]
          %v424 = vld [vmem:[#allocation3] sm:$0xff]
          %vm425 = vcmp.eq.s32.totalorder %v227, %v230
          %vm426 = vcmp.lt.s32.totalorder %v230, 4
          %vm427 = vmand %vm228, %vm426
          %vm428 = vmxor %vm425, 1
          %vm429 = vmand %vm427, %vm428
          %v430 = vld [vmem:[#allocation4] sm:$0xff]
          %v431 = vsel %vm425, %v423, 0.0
          %v432 = vsel %vm327, %v431, 0.0
          %v433 = vrot.slane %v432, 4
          %v434 = vadd.f32 %v432, %v433
          %v435 = vrot.slane %v434, 2
          %v436 = vadd.f32 %v434, %v435
          %v437 = vrot.slane %v436, 1
          %v438 = vadd.f32 %v436, %v437
          %440 = vset.pattern.permute.xlu0 0
          %441 = vperm.xlu0 %440, %v430
          %v442 = vpop.permute.xlu0 %441
          %v444 = vadd.f32 %v442, %v438
          %v445 = vmul.f32 %v423, 2.0
          %v446 = vsub.f32 %v444, %v445
          %v447 = vmax.f32 %v446, 1e-12
          %v448 = vrsqrt.pop %v447
          %v449 = vmul.f32 %v447, %v448
          %vm450 = vcmp.eq.f32.partialorder %v447, inf
          %v451 = vsel %vm450, %v447, %v449
          %vm452 = vcmp.eq.f32.partialorder %v447, 0.0
          %v453 = vand.u32 %v447, 2147483648
          %v454 = vsel %vm452, %v453, %v451
          %v455 = vsel %vm429, %v454, 0.0
          %v456 = vrsqrt.pop %v447
          %v457 = vsel %vm429, %v456, 0.0
          %vm458 = vcmp.gt.f32.partialorder %v455, 0.0
          %v459 = vsel %vm458, 1, 0
          %v460 = vcvt.s32.f32 %v459
          %v461 = vsel %vm327, %v460, 0.0
          %462 = vadd.xlane.f32.xlu0 %v461
          %v463 = vpop.xlane.xlu0 %462
          %v464 = vrot.slane %v463, 4
          %v465 = vadd.f32 %v463, %v464
          %v466 = vrot.slane %v465, 2
          %v467 = vadd.f32 %v465, %v466
          %v468 = vrot.slane %v467, 1
          %v469 = vadd.f32 %v467, %v468
          %s470 = vtos %v469
          %s471 = smax.f32 %s470, 1.0
          %v472 = vsel %vm458, %v455, 0.0
          %v473 = vsel %vm327, %v472, 0.0
          %474 = vadd.xlane.f32.xlu0 %v473
          %v475 = vpop.xlane.xlu0 %474
          %v476 = vrot.slane %v475, 4
          %v477 = vadd.f32 %v475, %v476
          %v478 = vrot.slane %v477, 2
          %v479 = vadd.f32 %v477, %v478
          %v480 = vrot.slane %v479, 1
          %v481 = vadd.f32 %v479, %v480
          %s482 = vtos %v481
          %v483 = vstv %s482
          %v484 = vrcp.pop %v483
          %v485 = vstv %s471
          %v486 = vmul.f32 %v485, %v484
          %v487 = vmul.f32 %v455, %v486
          %v488 = vld [vmem:[#allocation5] sm:$0xff]
          %v489 = vsel %vm425, %v424, 0.0
          %v490 = vsel %vm327, %v489, 0.0
          %v491 = vrot.slane %v490, 4
          %v492 = vadd.f32 %v490, %v491
          %v493 = vrot.slane %v492, 2
          %v494 = vadd.f32 %v492, %v493
          %v495 = vrot.slane %v494, 1
          %v496 = vadd.f32 %v494, %v495
          %498 = vset.pattern.permute.xlu0 0
          %499 = vperm.xlu0 %498, %v488
          %v500 = vpop.permute.xlu0 %499
          %v502 = vadd.f32 %v500, %v496
          %v503 = vmul.f32 %v424, 2.0
          %v504 = vsub.f32 %v502, %v503
          %v505 = vmax.f32 %v504, 1e-12
          %v506 = vrsqrt.pop %v505
          %v507 = vmul.f32 %v505, %v506
          %vm508 = vcmp.eq.f32.partialorder %v505, inf
          %v509 = vsel %vm508, %v505, %v507
          %vm510 = vcmp.eq.f32.partialorder %v505, 0.0
          %v511 = vand.u32 %v505, 2147483648
          %v512 = vsel %vm510, %v511, %v509
          %v513 = vsel %vm429, %v512, 0.0
          %v514 = vrsqrt.pop %v505
          %v515 = vsel %vm429, %v514, 0.0
          %vm516 = vcmp.gt.f32.partialorder %v513, 0.0
          %v517 = vsel %vm516, 1, 0
          %v518 = vcvt.s32.f32 %v517
          %v519 = vsel %vm327, %v518, 0.0
          %520 = vadd.xlane.f32.xlu0 %v519
          %v521 = vpop.xlane.xlu0 %520
          %v522 = vrot.slane %v521, 4
          %v523 = vadd.f32 %v521, %v522
          %v524 = vrot.slane %v523, 2
          %v525 = vadd.f32 %v523, %v524
          %v526 = vrot.slane %v525, 1
          %v527 = vadd.f32 %v525, %v526
          %s528 = vtos %v527
          %s529 = smax.f32 %s528, 1.0
          %v530 = vsel %vm516, %v513, 0.0
          %v531 = vsel %vm327, %v530, 0.0
          %532 = vadd.xlane.f32.xlu0 %v531
          %v533 = vpop.xlane.xlu0 %532
          %v534 = vrot.slane %v533, 4
          %v535 = vadd.f32 %v533, %v534
          %v536 = vrot.slane %v535, 2
          %v537 = vadd.f32 %v535, %v536
          %v538 = vrot.slane %v537, 1
          %v539 = vadd.f32 %v537, %v538
          %s540 = vtos %v539
          %v541 = vstv %s540
          %v542 = vrcp.pop %v541
          %v543 = vstv %s529
          %v544 = vmul.f32 %v543, %v542
          %v545 = vmul.f32 %v513, %v544
          %v546 = vsub.f32 %v487, %v545
          %v547 = vand.u32 2147483647, %v546
          %vm548 = vcmp.lt.f32.partialorder %v547, 1.0
          %v549 = vmul.f32 %v547, 0.5
          %v550 = vmul.f32 %v549, %v547
          %v551 = vsub.f32 %v547, 0.5
          %v552 = vsel %vm548, %v550, %v551
          %v553 = vsel %vm327, %v552, 0.0
          %554 = vadd.xlane.f32.xlu0 %v553
          %v555 = vpop.xlane.xlu0 %554
          %v556 = vrot.slane %v555, 4
          %v557 = vadd.f32 %v555, %v556
          %v558 = vrot.slane %v557, 2
          %v559 = vadd.f32 %v557, %v558
          %v560 = vrot.slane %v559, 1
          %v561 = vadd.f32 %v559, %v560
          %s562 = vtos %v561
          %s563 = smul.f32 %s562, 0.0625
          %564 = vst.msk [vmem:[#allocation6] sm:$0xff] %vm327, %v457
          %565 = vst.msk [vmem:[#allocation7] sm:$0xff] %vm327, %v515
          loop: start=0, step=1, limit=4
          $region45: #{tpu_custom_call.1} parent=43 // loop_pre_header
            _
          $region46: #{tpu_custom_call.1} parent=43 // loop_header
            %s567 = sphi 0, %s571
            %p568 = scmp.ge.s32.totalorder %s567, 4
            %v572 = vphi 0.0, %v644
          $region47: #{tpu_custom_call.1} parent=43 // loop_header_branch
            %570 = sbr.rel (%p568) target = $region51
          $region48: #{tpu_custom_call.1} parent=43 // loop_body
            %v573 = vstv %s567
            %vm574 = vcmp.eq.s32.totalorder %v230, %v573
            %s575 = scalar_lea.vmem [#allocation2], %s567
            %v576 = vld [vmem:[%s575] sm:$0x1]
            %s577 = scalar_lea.vmem [#allocation3], %s567
            %v578 = vld [vmem:[%s577] sm:$0x1]
            %s579 = scalar_lea.vmem [#allocation6], %s567
            %v580 = vld [vmem:[%s579] sm:$0x1]
            %s581 = scalar_lea.vmem [#allocation7], %s567
            %v582 = vld [vmem:[%s581] sm:$0x1]
            %s583 = scalar_lea.vmem [#allocation4], %s567
            %v584 = vld [vmem:[%s583] sm:$0x1]
            %s585 = scalar_lea.vmem [#allocation5], %s567
            %v586 = vld [vmem:[%s585] sm:$0x1]
            %v587 = vsel %vm574, %v423, 0.0
            %v588 = vsel %vm327, %v587, 0.0
            %589 = vadd.xlane.f32.xlu0 %v588
            %v590 = vpop.xlane.xlu0 %589
            %v591 = vsel %vm574, %v424, 0.0
            %v592 = vsel %vm327, %v591, 0.0
            %593 = vadd.xlane.f32.xlu0 %v592
            %v594 = vpop.xlane.xlu0 %593
            %v595 = vsel %vm574, %v457, 0.0
            %v596 = vsel %vm327, %v595, 0.0
            %597 = vadd.xlane.f32.xlu0 %v596
            %v598 = vpop.xlane.xlu0 %597
            %v599 = vsel %vm574, %v515, 0.0
            %v600 = vsel %vm327, %v599, 0.0
            %601 = vadd.xlane.f32.xlu0 %v600
            %v602 = vpop.xlane.xlu0 %601
            %v603 = vsub.f32 %v423, %v590
            %v604 = vlaneseq
            %v605 = vshrl.u32 %v604, 7
            %v606 = vsub.s32 0, %v605
            %v607 = vrot.slane %v576, %v606
            %v608 = vsub.f32 %v603, %v607
            %s610 = vtos %v584
            %v611 = vstv %s610
            %v613 = vadd.f32 %v608, %v611
            %v614 = vlaneseq
            %v615 = vshrl.u32 %v614, 7
            %v616 = vsub.s32 0, %v615
            %v617 = vrot.slane %v580, %v616
            %v618 = vmul.f32 %v598, %v617
            %v619 = vmul.f32 %v613, %v618
            %v620 = vsub.f32 %v424, %v594
            %v621 = vlaneseq
            %v622 = vshrl.u32 %v621, 7
            %v623 = vsub.s32 0, %v622
            %v624 = vrot.slane %v578, %v623
            %v625 = vsub.f32 %v620, %v624
            %s627 = vtos %v586
            %v628 = vstv %s627
            %v630 = vadd.f32 %v625, %v628
            %v631 = vlaneseq
            %v632 = vshrl.u32 %v631, 7
            %v633 = vsub.s32 0, %v632
            %v634 = vrot.slane %v582, %v633
            %v635 = vmul.f32 %v602, %v634
            %v636 = vmul.f32 %v630, %v635
            %v637 = vsub.f32 %v619, %v636
            %v638 = vand.u32 2147483647, %v637
            %vm639 = vcmp.lt.f32.partialorder %v638, 1.0
            %v640 = vmul.f32 %v638, 0.5
            %v641 = vmul.f32 %v640, %v638
            %v642 = vsub.f32 %v638, 0.5
            %v643 = vsel %vm639, %v641, %v642
            %v644 = vadd.f32 %v572, %v643
          $region49: #{tpu_custom_call.1} parent=43 // loop_footer
            %s571 = sadd.s32 1, %s567
          $region50: #{tpu_custom_call.1} parent=43 // loop_footer_branch
            %566 = sbr.rel target = $region46
          $region51: #{tpu_custom_call.1} parent=43 // loop_exit
            _
          %v645 = vsel %vm327, %v572, 0.0
          %646 = vadd.xlane.f32.xlu0 %v645
          %v647 = vpop.xlane.xlu0 %646
          %v648 = vrot.slane %v647, 4
          %v649 = vadd.f32 %v647, %v648
          %v650 = vrot.slane %v649, 2
          %v651 = vadd.f32 %v649, %v650
          %v652 = vrot.slane %v651, 1
          %v653 = vadd.f32 %v651, %v652
          %s654 = vtos %v653
          %s655 = smul.f32 %s654, 0.015625
          %s656 = smul.f32 %s655, 2.0
          %s657 = sadd.f32 %s563, %s656
          %s658 = scalar_lea.smem [#allocation13], 0
          %659 = sst [smem:[%s658]] %s657
        $region44: #{tpu_custom_call.1} parent=27 // pred_fallthru
          _
        // Predicated region
        $region52: #{tpu_custom_call.1} parent=27 // pred_check
          %p660 = pneg %p85
        $region53: #{tpu_custom_call.1} parent=27 // pred_check_branch
          %662 = sbr.rel (%p660) target = $region55
        $region54: #{tpu_custom_call.1} parent=27 // pred_region
          %s664 = ssub.s32 16, 16
          %665 = vsyncadd [#allocation10], %s664
          %668 = dma.smem_to_hbm [#allocation13], 16, %s2, [#allocation10]
        $region55: #{tpu_custom_call.1} parent=27 // pred_fallthru
          _
        // Predicated region
        $region56: #{tpu_custom_call.1} parent=27 // pred_check
          %p669 = pneg %p85
        $region57: #{tpu_custom_call.1} parent=27 // pred_check_branch
          %671 = sbr.rel (%p669) target = $region59
        $region58: #{tpu_custom_call.1} parent=27 // pred_region
          %672 = dma.done [#allocation10], 16
        $region59: #{tpu_custom_call.1} parent=27 // pred_fallthru
          _
        %673 = sfence
      $region28: #{tpu_custom_call.1} parent=5 // pred_fallthru
        _
      %p674 = scmp.le.s32.totalorder 2, %s15
      // Predicated region
      $region60: #{tpu_custom_call.1} parent=5 // pred_check
        %p675 = pneg %p674
      $region61: #{tpu_custom_call.1} parent=5 // pred_check_branch
        %677 = sbr.rel (%p675) target = $region63
      $region62: #{tpu_custom_call.1} parent=5 // pred_region
        %s678 = ssub.s32 %s15, 2
      $region63: #{tpu_custom_call.1} parent=5 // pred_fallthru
        _
    $region6: #{tpu_custom_call.1} parent=1 // loop_footer
      %s19 = sadd.s32 1, %s15
    $region7: #{tpu_custom_call.1} parent=1 // loop_footer_branch
      %14 = sbr.rel target = $region3
    $region8: #{tpu_custom_call.1} parent=1 // loop_exit
      _
    %679 = vsyncpa [#allocation9], 1
    %s680 = scalar_lea.sflag [#allocation9], 1
    %681 = vsyncpa %s680, 1
    %682 = vsyncpa [#allocation12], 1
    %s683 = scalar_lea.sflag [#allocation12], 1
    %684 = vsyncpa %s683, 1
    %685 = vsyncpa [#allocation10], 1
    %s686 = scalar_lea.sflag [#allocation10], 1
    %687 = vsyncpa %s686, 1

</llo_original>
